<compile_context>
chip_gen: v7x
topology: tpu7x:2x2x1
jax: 0.10.0
libtpu: 0.0.40
codegen_flags: <defaults>
</compile_context>

<pallas_src>
import functools
import math
from types import SimpleNamespace

import numpy as np

import jax
import jax.numpy as jnp
from jax.experimental import pallas as pl
from jax.experimental.pallas import tpu as pltpu


LANES = 128
_EPS = 1e-4
_LOG_EPS = math.log(_EPS)          # log(1e-4)
_LOG_1M_EPS = math.log1p(-_EPS)    # log(1 - 1e-4)


def _round_up(a, b):
    return ((a + b - 1) // b) * b


# ----------------------------------------------------------------------------
# FocalLoss kernel (CenterNet modified focal / _neg_loss), including _sigmoid.
# Consumes a (TR, 128) tile of the flattened heatmap and writes per-tile
# lane-wise partial sums [pos_loss, neg_loss, num_pos] (3, 128); the final
# reduction over tiles and lanes happens in JAX.
# ----------------------------------------------------------------------------
def _focal_kernel(logit_ref, gt_ref, out_ref, *, total, rows, elem_mask,
                  row_mask):
    x = logit_ref[...]
    gt = gt_ref[...]
    if x.dtype != jnp.float32:
        x = x.astype(jnp.float32)
    if gt.dtype != jnp.float32:
        gt = gt.astype(jnp.float32)

    tr = x.shape[0]
    validf = None
    if elem_mask or row_mask:
        # Tail handling: partial boundary blocks contain unspecified data, so
        # mask by global element / row index (static constants, no sentinel).
        row0 = pl.program_id(0) * tr
        rid = row0 + jax.lax.broadcasted_iota(jnp.int32, (tr, 1), 0)
        if elem_mask:
            lid = jax.lax.broadcasted_iota(jnp.int32, (1, LANES), 1)
            valid = (rid * LANES + lid) < total                # (tr, 128)
        else:
            valid = rid < rows                                 # (tr, 1)
        x = jnp.where(valid, x, 0.0)
        gt = jnp.where(valid, gt, 0.0)
        validf = valid.astype(jnp.float32)

    s = jax.nn.sigmoid(x)
    pred = jnp.clip(s, _EPS, 1.0 - _EPS)                       # _sigmoid clamp
    log_pred = jnp.log(pred)
    # log(1 - pred) = log(sigmoid(-x)) = log(sigmoid(x)) - x; clipping to
    # [log(1e-4), log(1-1e-4)] reproduces the clamp at both saturation ends.
    # One log instead of two (fewer EUP transcendentals).
    log_1m_pred = jnp.clip(log_pred - x, _LOG_EPS, _LOG_1M_EPS)

    pos = (gt == 1.0).astype(jnp.float32)                      # gt.eq(1)
    # `neg = gt.lt(1)` dropped: for gt in [0,1], (1-gt)^4 already zeroes gt==1.
    neg_w = jnp.square(jnp.square(1.0 - gt))                   # (1-gt)^4
    if validf is not None:
        neg_w = neg_w * validf                                 # kill tail elems

    pos_loss = log_pred * jnp.square(1.0 - pred) * pos
    neg_loss = log_1m_pred * jnp.square(pred) * neg_w

    out_ref[0:1, :] = jnp.sum(pos_loss, axis=0, keepdims=True)
    out_ref[1:2, :] = jnp.sum(neg_loss, axis=0, keepdims=True)
    out_ref[2:3, :] = jnp.sum(pos, axis=0, keepdims=True)


def focal_loss(hm_logits, gt_hm, tile_rows=4096):
    """FocalLoss on raw logits (sigmoid + clamp done in-kernel).

    Inputs may be bf16 or f32; they are cast to f32 inside the kernel, so a
    bf16 producer halves HBM traffic of this mem-bound kernel for free.
    """
    total = int(np.prod(hm_logits.shape))
    x = hm_logits.reshape(-1)
    g = gt_hm.reshape(-1)

    rem = total % LANES
    elem_mask = rem != 0
    if elem_mask:
        # Rare path (numel not a multiple of 128): a small 1-D pad is needed so
        # the free (rows, 128) reshape is legal; padded elements are masked
        # out in-kernel by the element-index check.
        pad = LANES - rem
        x = jnp.pad(x, (0, pad))
        g = jnp.pad(g, (0, pad))
    rows = (total + LANES - 1) // LANES
    x = x.reshape(rows, LANES)
    g = g.reshape(rows, LANES)

    tr = _round_up(min(tile_rows, _round_up(rows, 8)), 8)
    num_tiles = -(-rows // tr)
    row_mask = (rows % tr) != 0

    kernel = functools.partial(_focal_kernel, total=total, rows=rows,
                               elem_mask=elem_mask, row_mask=row_mask)

    bytes_accessed = (x.size * x.dtype.itemsize + g.size * g.dtype.itemsize
                      + num_tiles * 3 * LANES * 4)
    partials = pl.pallas_call(
        kernel,
        out_shape=jax.ShapeDtypeStruct((num_tiles, 3, LANES), jnp.float32),
        grid=(num_tiles,),
        in_specs=[
            pl.BlockSpec((tr, LANES), lambda i: (i, 0)),
            pl.BlockSpec((tr, LANES), lambda i: (i, 0)),
        ],
        # per-tile output block => no shared accumulator; grid axis can be
        # 'parallel'.
        out_specs=pl.BlockSpec((None, 3, LANES), lambda i: (i, 0, 0)),
        # TODO(synk): on v7x check that "parallel" actually shards this axis
        # across the 2 TensorCores; switch to pltpu.CORE_PARALLEL if not.
        compiler_params=pltpu.CompilerParams(
            dimension_semantics=("parallel",)),
        cost_estimate=pl.CostEstimate(
            flops=int(16 * total),
            transcendentals=int(2 * total),
            bytes_accessed=int(bytes_accessed)),
    )(x, g)

    sums = jnp.sum(partials, axis=(0, 2))                       # (3,)
    pos_loss, neg_loss, num_pos = sums[0], sums[1], sums[2]
    return jnp.where(num_pos == 0,
                     -neg_loss,
                     -(pos_loss + neg_loss) / jnp.maximum(num_pos, 1.0))


# ----------------------------------------------------------------------------
# Fused regression kernel: wh (L1) + dep (L1, sigmoid*80) + dep-IoU + reg (L1),
# all sharing ind / reg_mask.  One grid step per batch element.
#
#   ind_ref    : SMEM (B, K) int32        flattened-HW indices
#   mask_ref   : SMEM (B, K) float32      reg_mask (scalar per object)
#   nvalid_ref : SMEM (B, 1) int32        last valid object index + 1
#   t*_ref     : SMEM (B, K*C_h) float32  per-head targets (k-major, c-minor)
#   wh/dep/off : VMEM (C_h, HWB, 128)     lane-dense HW (native NCHW flatten,
#                                          no concat / transpose round-trip)
#   out_ref    : VMEM (5, 128)            lane-accumulated partials per batch:
#                                          rows = [wh, dep, iou, off, mask]
#
# Per object: ind = q*128 + r -> dynamic sublane-block slice (C,1,128), then
# lane-masked VPU accumulation into (1,128) rows; the cross-lane reduction is
# hoisted out of the loop entirely (done once in JAX on the partials).
# ----------------------------------------------------------------------------
def _fused_reg_kernel(ind_ref, mask_ref, nvalid_ref, twh_ref, tdep_ref,
                      toff_ref, wh_ref, dep_ref, off_ref, out_ref, *,
                      c_wh, c_dep, c_off):
    b = pl.program_id(0)
    lane = jax.lax.broadcasted_iota(jnp.int32, (1, LANES), 1)   # hoisted
    zero_row = jnp.zeros((1, LANES), jnp.float32)

    def load_slab(ref, q):
        slab = ref[:, pl.ds(q, 1), :]                           # (C_h, 1, 128)
        if slab.dtype != jnp.float32:
            slab = slab.astype(jnp.float32)
        return slab

    def body(k, carry):
        acc_wh, acc_dep, acc_iou, acc_off, acc_m = carry
        idx = ind_ref[b, k]
        m = mask_ref[b, k]
        q = idx // LANES
        r = idx - q * LANES
        lm = lane == r                                          # one-hot lanes

        wh_slab = load_slab(wh_ref, q)
        dep_slab = load_slab(dep_ref, q)
        off_slab = load_slab(off_ref, q)

        # Plain L1 heads: |p - t| * m on the selected lane only (VPU work,
        # no per-object XLU reduction).
        for c in range(c_wh):
            t = twh_ref[b, k * c_wh + c]
            acc_wh = acc_wh + jnp.where(lm, jnp.abs(wh_slab[c] - t) * m, 0.0)

        for c in range(c_dep):
            t = tdep_ref[b, k * c_dep + c]
            # dep head: _sigmoid(x) * 80 applied only on the gathered slab
            # (pure selection => identical to transforming the whole map).
            p = jnp.clip(jax.nn.sigmoid(dep_slab[c]), _EPS, 1.0 - _EPS) * 80.0
            acc_dep = acc_dep + jnp.where(lm, jnp.abs(p - t) * m, 0.0)
            # TODO(synk): exact RegL1LossDepIOU formula from PG-Net is not in
            # the reference snippet; per-channel masked (1 - min/max) depth-IoU
            # surrogate is used (matches the pure-JAX reference below).
            iou = jnp.minimum(p, t) / jnp.maximum(jnp.maximum(p, t), 1e-4)
            acc_iou = acc_iou + jnp.where(lm, (1.0 - iou) * m, 0.0)

        for c in range(c_off):
            t = toff_ref[b, k * c_off + c]
            acc_off = acc_off + jnp.where(lm, jnp.abs(off_slab[c] - t) * m, 0.0)

        acc_m = acc_m + jnp.where(lm, m, 0.0)
        return acc_wh, acc_dep, acc_iou, acc_off, acc_m

    # fori_loop (not a static Python unroll): bounds vreg live ranges at large
    # K and skips trailing masked-out object slots via the per-batch count.
    n = nvalid_ref[b, 0]
    init = (zero_row, zero_row, zero_row, zero_row, zero_row)
    acc_wh, acc_dep, acc_iou, acc_off, acc_m = jax.lax.fori_loop(
        0, n, body, init)

    out_ref[0:1, :] = acc_wh
    out_ref[1:2, :] = acc_dep
    out_ref[2:3, :] = acc_iou
    out_ref[3:4, :] = acc_off
    out_ref[4:5, :] = acc_m


def fused_reg_stats(wh_map, dep_map, reg_map, ind, reg_mask,
                    wh_tgt, dep_tgt, reg_tgt):
    """One fused pass over all regression heads sharing ind / reg_mask.

    Returns (num_wh, num_dep, num_iou, num_off, mask_sum) summed over the batch.
    """
    B, c_wh, H, W = wh_map.shape
    c_dep = dep_map.shape[1]
    c_off = reg_map.shape[1]
    HW = H * W
    K = ind.shape[1]

    def to_lane_blocks(m):
        c = m.shape[1]
        f = m.reshape(B, c, HW)                      # native NCHW flatten
        if HW % LANES:
            # Rare path: HW not a multiple of 128 needs a small pad so the
            # lane-dense reshape is legal (ind < HW never selects the pad).
            f = jnp.pad(f, ((0, 0), (0, 0), (0, LANES - HW % LANES)))
        hwb = f.shape[2] // LANES
        return f.reshape(B, c, hwb, LANES), hwb

    wh_f, hwb = to_lane_blocks(wh_map)
    dep_f, _ = to_lane_blocks(dep_map)
    off_f, _ = to_lane_blocks(reg_map)

    ind32 = ind.astype(jnp.int32)
    mask32 = reg_mask.astype(jnp.float32)
    # Last valid object index + 1 per batch element: lets the kernel's
    # fori_loop skip trailing masked-out slots (correct for any mask pattern).
    kplus1 = jnp.arange(1, K + 1, dtype=jnp.int32)[None, :]
    nvalid = jnp.max(jnp.where(mask32 > 0, kplus1, 0), axis=1)
    nvalid = nvalid.astype(jnp.int32).reshape(B, 1)

    twh = wh_tgt.astype(jnp.float32).reshape(B, K * c_wh)
    tdep = dep_tgt.astype(jnp.float32).reshape(B, K * c_dep)
    toff = reg_tgt.astype(jnp.float32).reshape(B, K * c_off)

    kernel = functools.partial(_fused_reg_kernel, c_wh=c_wh, c_dep=c_dep,
                               c_off=c_off)

    feat_block_bytes = ((c_wh + c_dep + c_off) * hwb * LANES
                        * wh_map.dtype.itemsize)
    cp_kwargs = dict(dimension_semantics=("parallel",))
    vmem_need = 2 * feat_block_bytes + (2 << 20)     # double-buffered inputs
    if vmem_need > (16 << 20):
        # Keep v7x's 64 MiB physical VMEM in mind.
        # TODO(synk): for very large HW (HW >> K*128), switch to an HBM-resident
        # per-object make_async_copy gather instead of the whole-map block.
        cp_kwargs["vmem_limit_bytes"] = int(min(vmem_need, 64 << 20))

    bytes_accessed = (B * feat_block_bytes
                      + (twh.size + tdep.size + toff.size
                         + ind32.size + mask32.size) * 4
                      + B * 5 * LANES * 4)
    out = pl.pallas_call(
        kernel,
        out_shape=jax.ShapeDtypeStruct((B, 5, LANES), jnp.float32),
        grid=(B,),
        in_specs=[
            pl.BlockSpec(memory_space=pltpu.MemorySpace.SMEM),   # ind    (B, K)
            pl.BlockSpec(memory_space=pltpu.MemorySpace.SMEM),   # mask   (B, K)
            pl.BlockSpec(memory_space=pltpu.MemorySpace.SMEM),   # nvalid (B, 1)
            pl.BlockSpec(memory_space=pltpu.MemorySpace.SMEM),   # wh targets
            pl.BlockSpec(memory_space=pltpu.MemorySpace.SMEM),   # dep targets
            pl.BlockSpec(memory_space=pltpu.MemorySpace.SMEM),   # off targets
            pl.BlockSpec((None, c_wh, hwb, LANES), lambda b: (b, 0, 0, 0)),
            pl.BlockSpec((None, c_dep, hwb, LANES), lambda b: (b, 0, 0, 0)),
            pl.BlockSpec((None, c_off, hwb, LANES), lambda b: (b, 0, 0, 0)),
        ],
        out_specs=pl.BlockSpec((None, 5, LANES), lambda b: (b, 0, 0)),
        compiler_params=pltpu.CompilerParams(**cp_kwargs),
        cost_estimate=pl.CostEstimate(
            flops=int(B * K * (c_wh + 4 * c_dep + c_off) * LANES * 4),
            transcendentals=int(B * K * c_dep * LANES),
            bytes_accessed=int(bytes_accessed)),
    )(ind32, mask32, nvalid, twh, tdep, toff, wh_f, dep_f, off_f)

    # Single (hoisted) cross-lane reduction over the (B, 5, 128) partials.
    totals = jnp.sum(out, axis=(0, 2))                           # (5,)
    return totals[0], totals[1], totals[2], totals[3], totals[4]


# ----------------------------------------------------------------------------
# FvdetLoss.forward
# ----------------------------------------------------------------------------
def fvdet_loss(outputs, batch, opt):
    zero = jnp.float32(0.0)
    hm_loss = wh_loss = dep_loss = dep_iou_loss = off_loss = zero
    ns = opt.num_stacks

    for s in range(ns):
        output = outputs[s]
        # output['hm'] = _sigmoid(output['hm'])        -> inside focal kernel
        # output['dep'] = _sigmoid(output['dep']) * 80 -> inside fused reg kernel
        hm_loss = hm_loss + focal_loss(output['hm'], batch['hm']) / ns

        need_reg = (opt.wh_weight > 0 or opt.dep_weight > 0
                    or (opt.reg_depth_iou and opt.dep_iou_weight > 0)
                    or (opt.reg_offset and opt.off_weight > 0))
        if need_reg:
            c_wh = output['wh'].shape[1]
            c_dep = output['dep'].shape[1]
            c_off = output['reg'].shape[1]
            num_wh, num_dep, num_iou, num_off, msum = fused_reg_stats(
                output['wh'], output['dep'], output['reg'],
                batch['ind'], batch['reg_mask'],
                batch['wh'], batch['dep'], batch['reg'])
            # RegL1Loss denominator is the channel-broadcast mask sum (+1e-4).
            if opt.wh_weight > 0:
                wh_loss = wh_loss + num_wh / (c_wh * msum + 1e-4) / ns
            if opt.dep_weight > 0:
                dep_loss = dep_loss + num_dep / (c_dep * msum + 1e-4) / ns
            if opt.reg_depth_iou and opt.dep_iou_weight > 0:
                dep_iou_loss = dep_iou_loss + num_iou / (c_dep * msum + 1e-4) / ns
            if opt.reg_offset and opt.off_weight > 0:
                off_loss = off_loss + num_off / (c_off * msum + 1e-4) / ns

    loss = (opt.hm_weight * hm_loss + opt.wh_weight * wh_loss
            + opt.dep_weight * dep_loss + opt.off_weight * off_loss
            + opt.dep_iou_weight * dep_iou_loss)
    loss_stats = {'loss': loss, 'hm_loss': hm_loss, 'wh_loss': wh_loss,
                  'dep_loss': dep_loss}
    if opt.reg_offset and opt.off_weight > 0:
        loss_stats['off_loss'] = off_loss
    if opt.reg_depth_iou and opt.dep_iou_weight > 0:
        loss_stats['dep_iou_loss'] = dep_iou_loss
    return loss, loss_stats


# ----------------------------------------------------------------------------
# Pure-JAX reference of the torch forward (for correctness checking).
# ----------------------------------------------------------------------------
def _ref_sig(x):
    return jnp.clip(jax.nn.sigmoid(x), 1e-4, 1.0 - 1e-4)


def _ref_focal(pred, gt):
    pos = (gt == 1.0).astype(jnp.float32)
    neg = (gt < 1.0).astype(jnp.float32)
    neg_w = jnp.power(1.0 - gt, 4)
    pos_l = jnp.log(pred) * jnp.square(1.0 - pred) * pos
    neg_l = jnp.log(1.0 - pred) * jnp.square(pred) * neg_w * neg
    num_pos, pos_s, neg_s = jnp.sum(pos), jnp.sum(pos_l), jnp.sum(neg_l)
    return jnp.where(num_pos == 0, -neg_s,
                     -(pos_s + neg_s) / jnp.maximum(num_pos, 1.0))


def _ref_gather(fmap, ind):
    B, C, H, W = fmap.shape
    f = jnp.transpose(fmap.reshape(B, C, H * W), (0, 2, 1))      # (B, HW, C)
    idx = jnp.broadcast_to(ind[:, :, None].astype(jnp.int32),
                           (B, ind.shape[1], C))
    return jnp.take_along_axis(f, idx, axis=1)                   # (B, K, C)


def _ref_reg_l1(fmap, mask, ind, target):
    pred = _ref_gather(fmap, ind)
    m = jnp.broadcast_to(mask[:, :, None].astype(jnp.float32), pred.shape)
    return jnp.sum(jnp.abs(pred * m - target * m)) / (jnp.sum(m) + 1e-4)


def _ref_dep_iou(fmap, mask, ind, target):
    pred = _ref_gather(fmap, ind)
    m = jnp.broadcast_to(mask[:, :, None].astype(jnp.float32), pred.shape)
    iou = jnp.minimum(pred, target) / jnp.maximum(
        jnp.maximum(pred, target), 1e-4)
    return jnp.sum((1.0 - iou) * m) / (jnp.sum(m) + 1e-4)


def _reference_fvdet_loss(outputs, batch, opt):
    ns = opt.num_stacks
    zero = jnp.float32(0.0)
    hm_loss = wh_loss = dep_loss = dep_iou_loss = off_loss = zero
    for s in range(ns):
        output = outputs[s]
        dep = _ref_sig(output['dep']) * 80.0
        hm_loss = hm_loss + _ref_focal(_ref_sig(output['hm']), batch['hm']) / ns
        if opt.wh_weight > 0:
            wh_loss = wh_loss + _ref_reg_l1(output['wh'], batch['reg_mask'],
                                            batch['ind'], batch['wh']) / ns
        if opt.dep_weight > 0:
            dep_loss = dep_loss + _ref_reg_l1(dep, batch['reg_mask'],
                                              batch['ind'], batch['dep']) / ns
        if opt.reg_depth_iou and opt.dep_iou_weight > 0:
            dep_iou_loss = dep_iou_loss + _ref_dep_iou(dep, batch['reg_mask'],
                                                       batch['ind'],
                                                       batch['dep']) / ns
        if opt.reg_offset and opt.off_weight > 0:
            off_loss = off_loss + _ref_reg_l1(output['reg'], batch['reg_mask'],
                                              batch['ind'], batch['reg']) / ns
    loss = (opt.hm_weight * hm_loss + opt.wh_weight * wh_loss
            + opt.dep_weight * dep_loss + opt.off_weight * off_loss
            + opt.dep_iou_weight * dep_iou_loss)
    return loss, {'loss': loss, 'hm_loss': hm_loss, 'wh_loss': wh_loss,
                  'dep_loss': dep_loss, 'off_loss': off_loss,
                  'dep_iou_loss': dep_iou_loss}


if __name__ == "__main__":
    key = jax.random.PRNGKey(0)
    ks = jax.random.split(key, 12)

    B, C_HM, H, W, K = 2, 2, 16, 16, 8   # HW = 256 (multiple of 128)

    # network outputs (raw logits for 'hm' and 'dep', NCHW)
    outputs = [{
        'hm':  jax.random.normal(ks[0], (B, C_HM, H, W), jnp.float32),
        'wh':  jax.random.normal(ks[1], (B, 2, H, W), jnp.float32),
        'dep': jax.random.normal(ks[2], (B, 1, H, W), jnp.float32),
        'reg': jax.random.normal(ks[3], (B, 2, H, W), jnp.float32),
    }]

    gt_hm = jax.random.uniform(ks[4], (B, C_HM, H, W), jnp.float32) * 0.9
    gt_hm = gt_hm.at[:, 0, 3, 5].set(1.0).at[:, 1, 10, 2].set(1.0)

    ind = jax.random.randint(ks[5], (B, K), 0, H * W, dtype=jnp.int32)
    # Gaps + trailing zeros: exercises the in-range zero mask and the
    # fori_loop trip-count bound (last valid + 1 = 5 < K = 8).
    reg_mask = jnp.array([[1, 1, 0, 1, 1, 0, 0, 0],
                          [1, 0, 1, 1, 1, 0, 0, 0]], jnp.float32)

    batch = {
        'hm': gt_hm,
        'ind': ind,
        'reg_mask': reg_mask,
        'wh':  jax.random.uniform(ks[6], (B, K, 2), jnp.float32) * 4.0,
        'dep': jax.random.uniform(ks[7], (B, K, 1), jnp.float32) * 60.0 + 1.0,
        'reg': jax.random.uniform(ks[8], (B, K, 2), jnp.float32),
    }

    opt = SimpleNamespace(
        num_stacks=1,
        hm_weight=1.0, wh_weight=0.1, dep_weight=1.0,
        off_weight=1.0, dep_iou_weight=1.0,
        reg_offset=True, reg_depth_iou=True,
    )

    loss, loss_stats = fvdet_loss(outputs, batch, opt)
    jax.block_until_ready(loss)
    for v in loss_stats.values():
        jax.block_until_ready(v)

    # correctness check against the pure-JAX reference of the torch forward
    ref_loss, ref_stats = _reference_fvdet_loss(outputs, batch, opt)
    np.testing.assert_allclose(np.asarray(loss), np.asarray(ref_loss),
                               rtol=1e-3, atol=1e-5)
    for name in ('hm_loss', 'wh_loss', 'dep_loss', 'off_loss', 'dep_iou_loss'):
        np.testing.assert_allclose(np.asarray(loss_stats[name]),
                                   np.asarray(ref_stats[name]),
                                   rtol=1e-3, atol=1e-5)

    # Extra focal checks exercising the in-kernel tail-masking paths:
    #   numel = 2*3*20*20 = 2400 -> lane tail (2400 % 128 != 0); tile_rows=8
    #   additionally gives a multi-tile grid with a partial last row-block.
    hm2 = jax.random.normal(ks[9], (2, 3, 20, 20), jnp.float32)
    gt2 = jax.random.uniform(ks[10], (2, 3, 20, 20), jnp.float32) * 0.9
    gt2 = gt2.at[:, 0, 1, 2].set(1.0)
    ref2 = _ref_focal(_ref_sig(hm2), gt2)
    for tile in (8, 4096):
        got2 = focal_loss(hm2, gt2, tile_rows=tile)
        jax.block_until_ready(got2)
        np.testing.assert_allclose(np.asarray(got2), np.asarray(ref2),
                                   rtol=1e-3, atol=1e-5)

    print("KERNEL_OK")
</pallas_src>

<mosaic_0001>
module attributes {stable_mosaic.version = 11 : i64} {
  func.func @_focal_kernel(%arg0: i32, %arg1: memref<8x128xf32, #tpu.memory_space<vmem>>, %arg2: memref<8x128xf32, #tpu.memory_space<vmem>>, %arg3: memref<1x3x128xf32, #tpu.memory_space<vmem>>) attributes {dimension_semantics = [#tpu.dimension_semantics<parallel>], iteration_bounds = array<i64: 1>, scalar_prefetch = 0 : i64, scratch_operands = 0 : i64, tpu.core_type = #tpu.core_type<tc>, window_params = [{transform_indices = @transform_0, window_bounds = array<i64: 8, 128>}, {transform_indices = @transform_1, window_bounds = array<i64: 8, 128>}, {transform_indices = @transform_2, window_bounds = array<i64: 1, 3, 128>}]} {
    %c0 = arith.constant 0 : index
    %c0_0 = arith.constant 0 : index
    %0 = vector.load %arg1[%c0, %c0_0] : memref<8x128xf32, #tpu.memory_space<vmem>>, vector<8x128xf32>
    %c0_1 = arith.constant 0 : index
    %c0_2 = arith.constant 0 : index
    %1 = vector.load %arg2[%c0_1, %c0_2] : memref<8x128xf32, #tpu.memory_space<vmem>>, vector<8x128xf32>
    %2 = arith.negf %0 : vector<8x128xf32>
    %3 = math.exp %2 : vector<8x128xf32>
    %cst = arith.constant 1.000000e+00 : f32
    %4 = vector.broadcast %cst : f32 to vector<8x128xf32>
    %5 = arith.addf %4, %3 : vector<8x128xf32>
    %6 = arith.divf %4, %5 : vector<8x128xf32>
    %cst_3 = arith.constant 9.99999974E-5 : f32
    %cst_4 = arith.constant 0.999899983 : f32
    %7 = vector.broadcast %cst_3 : f32 to vector<8x128xf32>
    %8 = arith.maximumf %7, %6 : vector<8x128xf32>
    %9 = vector.broadcast %cst_4 : f32 to vector<8x128xf32>
    %10 = arith.minimumf %9, %8 : vector<8x128xf32>
    %11 = math.log %10 : vector<8x128xf32>
    %12 = arith.subf %11, %0 : vector<8x128xf32>
    %cst_5 = arith.constant -9.21034049 : f32
    %cst_6 = arith.constant -1.000050e-04 : f32
    %13 = vector.broadcast %cst_5 : f32 to vector<8x128xf32>
    %14 = arith.maximumf %13, %12 : vector<8x128xf32>
    %15 = vector.broadcast %cst_6 : f32 to vector<8x128xf32>
    %16 = arith.minimumf %15, %14 : vector<8x128xf32>
    %cst_7 = arith.constant 1.000000e+00 : f32
    %17 = vector.broadcast %cst_7 : f32 to vector<8x128xf32>
    %18 = arith.cmpf oeq, %1, %17 : vector<8x128xf32>
    %19 = arith.extui %18 : vector<8x128xi1> to vector<8x128xi32>
    %20 = arith.sitofp %19 : vector<8x128xi32> to vector<8x128xf32>
    %cst_8 = arith.constant 1.000000e+00 : f32
    %21 = vector.broadcast %cst_8 : f32 to vector<8x128xf32>
    %22 = arith.subf %21, %1 : vector<8x128xf32>
    %23 = arith.mulf %22, %22 : vector<8x128xf32>
    %24 = arith.mulf %23, %23 : vector<8x128xf32>
    %cst_9 = arith.constant 1.000000e+00 : f32
    %25 = vector.broadcast %cst_9 : f32 to vector<8x128xf32>
    %26 = arith.subf %25, %10 : vector<8x128xf32>
    %27 = arith.mulf %26, %26 : vector<8x128xf32>
    %28 = arith.mulf %11, %27 : vector<8x128xf32>
    %29 = arith.mulf %28, %20 : vector<8x128xf32>
    %30 = arith.mulf %10, %10 : vector<8x128xf32>
    %31 = arith.mulf %16, %30 : vector<8x128xf32>
    %32 = arith.mulf %31, %24 : vector<8x128xf32>
    %cst_10 = arith.constant dense<0.000000e+00> : vector<128xf32>
    %33 = vector.multi_reduction <add>, %29, %cst_10 [0] : vector<8x128xf32> to vector<128xf32>
    %34 = vector.shape_cast %33 : vector<128xf32> to vector<1x128xf32>
    %c0_11 = arith.constant 0 : index
    %c0_12 = arith.constant 0 : index
    %c0_13 = arith.constant 0 : index
    %35 = vector.load %arg3[%c0_11, %c0_12, %c0_13] : memref<1x3x128xf32, #tpu.memory_space<vmem>>, vector<1x1x128xf32>
    %36 = vector.shape_cast %35 : vector<1x1x128xf32> to vector<1x128xf32>
    %37 = vector.shape_cast %34 : vector<1x128xf32> to vector<1x1x128xf32>
    tpu.vector_store %arg3[%c0_11, %c0_12, %c0_13], %37 {strides = array<i32>} : memref<1x3x128xf32, #tpu.memory_space<vmem>>, vector<1x1x128xf32>,
    %cst_14 = arith.constant dense<0.000000e+00> : vector<128xf32>
    %38 = vector.multi_reduction <add>, %32, %cst_14 [0] : vector<8x128xf32> to vector<128xf32>
    %39 = vector.shape_cast %38 : vector<128xf32> to vector<1x128xf32>
    %c0_15 = arith.constant 0 : index
    %c1 = arith.constant 1 : index
    %c0_16 = arith.constant 0 : index
    %40 = vector.load %arg3[%c0_15, %c1, %c0_16] : memref<1x3x128xf32, #tpu.memory_space<vmem>>, vector<1x1x128xf32>
    %41 = vector.shape_cast %40 : vector<1x1x128xf32> to vector<1x128xf32>
    %42 = vector.shape_cast %39 : vector<1x128xf32> to vector<1x1x128xf32>
    tpu.vector_store %arg3[%c0_15, %c1, %c0_16], %42 {strides = array<i32>} : memref<1x3x128xf32, #tpu.memory_space<vmem>>, vector<1x1x128xf32>,
    %cst_17 = arith.constant dense<0.000000e+00> : vector<128xf32>
    %43 = vector.multi_reduction <add>, %20, %cst_17 [0] : vector<8x128xf32> to vector<128xf32>
    %44 = vector.shape_cast %43 : vector<128xf32> to vector<1x128xf32>
    %c0_18 = arith.constant 0 : index
    %c2 = arith.constant 2 : index
    %c0_19 = arith.constant 0 : index
    %45 = vector.load %arg3[%c0_18, %c2, %c0_19] : memref<1x3x128xf32, #tpu.memory_space<vmem>>, vector<1x1x128xf32>
    %46 = vector.shape_cast %45 : vector<1x1x128xf32> to vector<1x128xf32>
    %47 = vector.shape_cast %44 : vector<1x128xf32> to vector<1x1x128xf32>
    tpu.vector_store %arg3[%c0_18, %c2, %c0_19], %47 {strides = array<i32>} : memref<1x3x128xf32, #tpu.memory_space<vmem>>, vector<1x1x128xf32>,
    return
  }
  func.func @transform_0(%arg0: i32) -> (i32, i32) {
    %c0_i32 = arith.constant 0 : i32
    %c0_i32_0 = arith.constant 0 : i32
    return %arg0, %c0_i32 : i32, i32
  }
  func.func @transform_1(%arg0: i32) -> (i32, i32) {
    %c0_i32 = arith.constant 0 : i32
    %c0_i32_0 = arith.constant 0 : i32
    return %arg0, %c0_i32 : i32, i32
  }
  func.func @transform_2(%arg0: i32) -> (i32, i32, i32) {
    %c0_i32 = arith.constant 0 : i32
    %c0_i32_0 = arith.constant 0 : i32
    %c0_i32_1 = arith.constant 0 : i32
    return %arg0, %c0_i32, %c0_i32_0 : i32, i32, i32
  }
}

</mosaic_0001>

<llo_original>
// kernel: tpu_custom_call.1
$region0: #{tpu_custom_call.1}
  #allocation0 [shape = 'u32[]', space=smem, size = 0x4, offset = 0x4, fixed_abs, tag = 'smem constant byte address 0x4 - core index']
  #allocation1 [shape = 'u32[144,128]{1,0:T(1,128)}', space=vmem, size = 0x12000, scoped, tag = 'internal scratch']
  %s0 = inlined_call_operand.hbm [shape: f32[8,128], index: 0, kind: input, shape index: {}]
  %s1 = inlined_call_operand.hbm [shape: f32[8,128], index: 1, kind: input, shape index: {}]
  %s2 = inlined_call_operand.vmem [shape: f32[1,3,128], index: 2, kind: output, shape index: {}]
  %s3 = sld [smem:[#allocation0]]
  $region26: #{tpu_custom_call.1} parent=0
    _
  %s5 = ssub.s32 1, %s3
  %s6 = scalar_select 0, %s5, %s3
  $region1: #{tpu_custom_call.1} parent=0
    #allocation2 [shape = 'u8[4096]{0}', space=vmem, size = 0x1000, scoped, tag = 'input window, operand 0, single buffered']
    #allocation3 [shape = 's32[1]{0}', space=sflag, size = 0x4, scoped, tag = 'scoped memory for tpu_custom_call.1']
    #allocation4 [shape = 'u8[4096]{0}', space=vmem, size = 0x1000, scoped, tag = 'input window, operand 1, single buffered']
    #allocation5 [shape = 's32[1]{0}', space=sflag, size = 0x4, scoped, tag = 'scoped memory for tpu_custom_call.1']
    %7 = vsyncpa [#allocation3], 0
    %8 = vsyncpa [#allocation5], 0
    // Predicated region
    $region2: #{tpu_custom_call.1} parent=1 // pred_check
      _
    $region3: #{tpu_custom_call.1} parent=1 // pred_check_branch
      %10 = sbr.rel (0) target = $region5
    $region4: #{tpu_custom_call.1} parent=1 // pred_region
      %s12 = ssub.s32 128, 128
      %13 = vsyncadd [#allocation3], %s12
      %s15 = sshll.u32 [#allocation2], 4
      %s16 = int_to_ptr.vmem [resolvable:$true] %s15
      %18 = dma.hbm_to_vmem [thread:$0]  %s0, 128, %s16, [#allocation3]
    $region5: #{tpu_custom_call.1} parent=1 // pred_fallthru
      _
    // Predicated region
    $region6: #{tpu_custom_call.1} parent=1 // pred_check
      _
    $region7: #{tpu_custom_call.1} parent=1 // pred_check_branch
      %20 = sbr.rel (0) target = $region9
    $region8: #{tpu_custom_call.1} parent=1 // pred_region
      %s22 = ssub.s32 128, 128
      %23 = vsyncadd [#allocation5], %s22
      %s25 = sshll.u32 [#allocation4], 4
      %s26 = int_to_ptr.vmem [resolvable:$true] %s25
      %28 = dma.hbm_to_vmem [thread:$0]  %s1, 128, %s26, [#allocation5]
    $region9: #{tpu_custom_call.1} parent=1 // pred_fallthru
      _
    // Predicated region
    $region10: #{tpu_custom_call.1} parent=1 // pred_check
      _
    $region11: #{tpu_custom_call.1} parent=1 // pred_check_branch
      %30 = sbr.rel (0) target = $region13
    $region12: #{tpu_custom_call.1} parent=1 // pred_region
      %31 = dma.done [#allocation3], 128
    $region13: #{tpu_custom_call.1} parent=1 // pred_fallthru
      _
    // Predicated region
    $region14: #{tpu_custom_call.1} parent=1 // pred_check
      _
    $region15: #{tpu_custom_call.1} parent=1 // pred_check_branch
      %33 = sbr.rel (0) target = $region17
    $region16: #{tpu_custom_call.1} parent=1 // pred_region
      %34 = dma.done [#allocation5], 128
    $region17: #{tpu_custom_call.1} parent=1 // pred_fallthru
      _
    %v35 = vld [vmem:[#allocation2] sm:$0xff]
    %v36 = vld [vmem:[#allocation4] sm:$0xff]
    %v37 = vxor.u32 %v35, 2147483648
    %v38 = vmul.f32 %v37, 1.442695
    %v39 = vpow.pop %v38
    %v40 = vadd.f32 %v39, 1.0
    %v41 = vrcp.pop %v40
    %v42 = vmul.f32 1.0, %v41
    %v43 = vmax.f32 %v42, 0.0001
    %v44 = vmin.f32 %v43, 0.9999
    %v45 = vlog2.pop %v44
    %v46 = vmul.f32 %v45, 0.6931472
    %v47 = vsub.f32 %v46, %v35
    %v48 = vmax.f32 %v47, -9.2103405
    %v49 = vmin.f32 %v48, -0.000100005
    %vm50 = vcmp.eq.f32.partialorder %v36, 1.0
    %v51 = vsel %vm50, 1, 0
    %v52 = vcvt.s32.f32 %v51
    %v53 = vsub.f32 1.0, %v36
    %v54 = vmul.f32 %v53, %v53
    %v55 = vmul.f32 %v54, %v54
    %v56 = vsub.f32 1.0, %v44
    %v57 = vmul.f32 %v56, %v56
    %v58 = vmul.f32 %v46, %v57
    %v59 = vmul.f32 %v58, %v52
    %v60 = vmul.f32 %v44, %v44
    %v61 = vmul.f32 %v49, %v60
    %v62 = vmul.f32 %v61, %v55
    %v63 = vrot.slane %v59, 4
    %v64 = vadd.f32 %v59, %v63
    %v65 = vrot.slane %v64, 2
    %v66 = vadd.f32 %v64, %v65
    %v67 = vrot.slane %v66, 1
    %v68 = vadd.f32 %v66, %v67
    %69 = vst [vmem:[%s2] sm:$0x1] %v68
    %v70 = vrot.slane %v62, 4
    %v71 = vadd.f32 %v62, %v70
    %v72 = vrot.slane %v71, 2
    %v73 = vadd.f32 %v71, %v72
    %v74 = vrot.slane %v73, 1
    %v75 = vadd.f32 %v73, %v74
    %76 = vst [vmem:[%s2 + $0x1] sm:$0x1] %v75
    %v77 = vrot.slane %v52, 4
    %v78 = vadd.f32 %v52, %v77
    %v79 = vrot.slane %v78, 2
    %v80 = vadd.f32 %v78, %v79
    %v81 = vrot.slane %v80, 1
    %v82 = vadd.f32 %v80, %v81
    %83 = vst [vmem:[%s2 + $0x2] sm:$0x1] %v82
    // Predicated region
    $region18: #{tpu_custom_call.1} parent=1 // pred_check
      _
    $region19: #{tpu_custom_call.1} parent=1 // pred_check_branch
      %85 = sbr.rel (0) target = $region21
    $region20: #{tpu_custom_call.1} parent=1 // pred_region
      _
    $region21: #{tpu_custom_call.1} parent=1 // pred_fallthru
      _
    // Predicated region
    $region22: #{tpu_custom_call.1} parent=1 // pred_check
      _
    $region23: #{tpu_custom_call.1} parent=1 // pred_check_branch
      %87 = sbr.rel (0) target = $region25
    $region24: #{tpu_custom_call.1} parent=1 // pred_region
      _
    $region25: #{tpu_custom_call.1} parent=1 // pred_fallthru
      _
    %88 = vsyncpa [#allocation3], 1
    %89 = vsyncpa [#allocation5], 1

</llo_original>
